<compile_context>
chip_gen: v7x
topology: tpu7x:2x2x1
jax: 0.10.0
libtpu: 0.0.40
codegen_flags: <defaults>
</compile_context>

<pallas_src>
import functools

import jax
import jax.numpy as jnp
from jax.experimental import pallas as pl
from jax.experimental.pallas import tpu as pltpu


_LEAKY_SLOPE = 0.15   # nn.LeakyReLU(0.15) in the module
_HIDDEN = 512         # fixed by the module: nn.Linear(units, 512)


def _round_up(x, m):
    return (x + m - 1) // m * m


def _sublane(dtype):
    """Minimum sublane multiple for cleanly packed vreg tiles of this dtype."""
    return {1: 32, 2: 16, 4: 8}[jnp.dtype(dtype).itemsize]


def _vmem_capacity_bytes(default=64 * 1024 * 1024):
    """Physical VMEM of the local chip; falls back to the smallest gen (v7x)."""
    try:
        return int(pltpu.get_tpu_info().vmem_capacity_bytes)
    except Exception:  # defensive: interpret mode / very old runtimes
        return default


def mlp_head_kernel(x_ref, w1_ref, b1_ref, w2_ref, b2_ref, o_ref, *, inv_hw):
    """One batch tile: in-kernel global avg-pool -> linear1 -> LeakyReLU -> out.

    x_ref : (TN, C, HW)    extractor features (streaming dtype, bf16 by default)
    w1_ref: (C, 512)       spectrally-normalized linear weight (streaming dtype)
    b1_ref: (1, 512)       f32 bias
    w2_ref: (512, NOUT_P)  output weight, lane-padded to a multiple of 128
    b2_ref: (1, NOUT_P)    f32 bias (lane-padded)
    o_ref : (TN, NOUT_P)   f32 lane-dense output tile
    """
    # Global average pool: cross-lane (XLU) sum over the HW axis in f32.
    # The 1/HW scale is applied on the f32 accumulator after the matmul
    # (better numerics than folding it into a bf16 weight).
    pooled = jnp.sum(x_ref[...].astype(jnp.float32), axis=-1)          # (TN, C)

    h = jnp.dot(pooled.astype(w1_ref.dtype), w1_ref[...],
                preferred_element_type=jnp.float32)                     # MXU
    h = h * inv_hw + b1_ref[...]
    h = jnp.where(h >= 0, h, _LEAKY_SLOPE * h)                          # VPU f32

    o = jnp.dot(h.astype(w2_ref.dtype), w2_ref[...],
                preferred_element_type=jnp.float32)                     # MXU
    o_ref[...] = (o + b2_ref[...]).astype(o_ref.dtype)


def prepare_head_params(w1_sn, b1, w2, b2, *, compute_dtype=jnp.bfloat16):
    """One-time (parameter-setup) prep, hoisted out of the per-forward path.

    * weights cast to the streaming dtype (bf16 default: the head is HBM-bound,
      so halving x/weight DMA is the dominant win; accumulation stays f32 in the
      kernel, so v5e's lack of bf16 VPU/EUP is irrelevant),
    * output layer lane-padded to a multiple of 128 for unmasked stores,
    * no pool-into-weight expansion (pooling happens in-kernel).
    """
    c, hid = w1_sn.shape
    n_out = w2.shape[1]
    nout_p = _round_up(n_out, 128)
    return dict(
        w1=w1_sn.astype(compute_dtype),
        b1=b1.reshape(1, hid).astype(jnp.float32),
        w2=jnp.pad(w2, ((0, 0), (0, nout_p - n_out))).astype(compute_dtype),
        b2=jnp.pad(b2, (0, nout_p - n_out)).reshape(1, nout_p).astype(jnp.float32),
        n_out=n_out,
    )


def single_path_mlp(x_nchw, params, *, max_block_n=512):
    """x_nchw: (N, C, H, W) extractor output; returns (N, n_out) float32."""
    w1, b1, w2, b2 = params["w1"], params["b1"], params["w2"], params["b2"]
    n_out = params["n_out"]
    N, C, H, W = x_nchw.shape
    HW = H * W
    c_w, hid = w1.shape
    assert c_w == C, "extractor channel count does not match linear weight"
    nout_p = w2.shape[1]

    compute_dtype = w1.dtype
    x_item = jnp.dtype(compute_dtype).itemsize
    sublane = _sublane(compute_dtype)

    # x streamed in the weights' dtype; the full H*W axis is the lane (last)
    # dim of each block so the in-kernel pool is a plain lane reduce.
    x_flat = x_nchw.reshape(N, C, HW).astype(compute_dtype)

    # --- VMEM-aware batch tiling -------------------------------------------
    # Budget ~50% of physical VMEM (v5e/v6e: 128 MiB -> 64 MiB, v7x: 64 -> 32),
    # size the batch tile against 85% of it to leave compiler headroom.
    budget = max(_vmem_capacity_bytes() // 2, 16 * 1024 * 1024)
    sizing_budget = int(budget * 0.85)

    k_row = C * HW
    per_row = (2 * k_row * x_item                  # x block, double-buffered
               + k_row * 4                         # in-kernel f32 upcast for pooling
               + (C + 3 * hid + nout_p) * 4        # pooled / hidden activations (f32)
               + 2 * nout_p * 4)                   # f32 out block, double-buffered
    resident = ((C * hid + hid * nout_p) * x_item  # single-buffered weights
                + (hid + nout_p) * 4)              # single-buffered biases

    n_pad = _round_up(max(N, sublane), sublane)
    avail = max(sizing_budget - resident, sublane * per_row)
    cap = max(sublane, (avail // per_row) // sublane * sublane)
    tn = max(sublane, min(n_pad, max_block_n, cap) // sublane * sublane)

    # v7x has 2 TensorCores: keep >= 2 "parallel" grid steps whenever the batch
    # allows so both cores get work (costs only ~0.35us/step on 1-TC chips).
    half = (n_pad // 2) // sublane * sublane
    if half >= sublane:
        tn = min(tn, half)

    n_pad = _round_up(n_pad, tn)
    if n_pad != N:
        x_flat = jnp.pad(x_flat, ((0, n_pad - N), (0, 0), (0, 0)))

    grid = (n_pad // tn,)

    # Cost estimate for the in-kernel-pool formulation (pool adds + 2 matmuls).
    flops = 2 * n_pad * (C * hid + hid * nout_p) + n_pad * C * HW
    bytes_accessed = (n_pad * C * HW * x_item
                      + (C * hid + hid * nout_p) * x_item
                      + (hid + nout_p) * 4
                      + n_pad * nout_p * 4)

    kernel = functools.partial(mlp_head_kernel, inv_hw=1.0 / float(HW))

    out = pl.pallas_call(
        kernel,
        out_shape=jax.ShapeDtypeStruct((n_pad, nout_p), jnp.float32),
        grid_spec=pltpu.PrefetchScalarGridSpec(
            num_scalar_prefetch=0,
            grid=grid,
            in_specs=[
                # x: streamed per batch tile (default double-buffering).
                pl.BlockSpec((tn, C, HW), lambda i: (i, 0, 0)),
                # Weights/biases never change block index -> single-buffer them;
                # the saved VMEM feeds straight back into a larger batch tile.
                pl.BlockSpec((C, hid), lambda i: (0, 0),
                             pipeline_mode=pl.Buffered(1)),
                pl.BlockSpec((1, hid), lambda i: (0, 0),
                             pipeline_mode=pl.Buffered(1)),
                pl.BlockSpec((hid, nout_p), lambda i: (0, 0),
                             pipeline_mode=pl.Buffered(1)),
                pl.BlockSpec((1, nout_p), lambda i: (0, 0),
                             pipeline_mode=pl.Buffered(1)),
            ],
            out_specs=pl.BlockSpec((tn, nout_p), lambda i: (i, 0)),
        ),
        compiler_params=pltpu.CompilerParams(
            dimension_semantics=("parallel",),   # batch shards across TCs (v7x)
            vmem_limit_bytes=int(budget),
        ),
        cost_estimate=pl.CostEstimate(flops=int(flops), transcendentals=0,
                                      bytes_accessed=int(bytes_accessed)),
    )(x_flat, w1, b1, w2, b2)

    return out[:N, :n_out]


def spectral_normalize(w, n_iters=50):
    """W / sigma_max(W) via power iteration (parameter-setup glue, plain JAX)."""
    u = jax.random.normal(jax.random.PRNGKey(1), (w.shape[1],), jnp.float32)

    def body(_, u):
        v = w @ u
        v = v / (jnp.linalg.norm(v) + 1e-12)
        u = w.T @ v
        u = u / (jnp.linalg.norm(u) + 1e-12)
        return u

    u = jax.lax.fori_loop(0, n_iters, body, u)
    v = w @ u
    v = v / (jnp.linalg.norm(v) + 1e-12)
    sigma = v @ (w @ u)
    return w / sigma


if __name__ == "__main__":
    # Small shapes: extractor.out_shape = (C, H, W) = (4, 16, 16), batch = 2.
    N, C, H, W = 2, 4, 16, 16
    N_OUT = 10

    key = jax.random.PRNGKey(0)
    kx, kw1, kw2 = jax.random.split(key, 3)

    # Deterministic init mirroring param_init for nn.Linear: w ~ N(0,0.01), b=0.
    x = jax.random.normal(kx, (N, C, H, W), jnp.float32)
    w1 = 0.01 * jax.random.normal(kw1, (C, _HIDDEN), jnp.float32)
    b1 = jnp.zeros((_HIDDEN,), jnp.float32)
    w2 = 0.01 * jax.random.normal(kw2, (_HIDDEN, N_OUT), jnp.float32)
    b2 = jnp.zeros((N_OUT,), jnp.float32)

    # spectral_norm(self.linear): divide weight by its largest singular value.
    w1_sn = spectral_normalize(w1)

    # Plain-JAX reference of the same head (pool -> linear -> act -> out).
    pooled = x.reshape(N, C, H * W).mean(-1)
    ref = pooled @ w1_sn + b1
    ref = jnp.where(ref >= 0, ref, _LEAKY_SLOPE * ref)
    ref = ref @ w2 + b2

    # Default path: bf16 streaming (x + weights), f32 accumulation.
    params = prepare_head_params(w1_sn, b1, w2, b2)           # bf16 default
    out = single_path_mlp(x, params)
    jax.block_until_ready(out)
    assert out.shape == (N, N_OUT) and out.dtype == jnp.float32
    assert jnp.allclose(out, ref, atol=5e-3, rtol=5e-2), \
        float(jnp.max(jnp.abs(out - ref)))

    # f32 path for a tight numerics check.
    params_f32 = prepare_head_params(w1_sn, b1, w2, b2, compute_dtype=jnp.float32)
    out_f32 = single_path_mlp(x, params_f32)
    jax.block_until_ready(out_f32)
    assert out_f32.shape == (N, N_OUT)
    assert jnp.allclose(out_f32, ref, atol=1e-4, rtol=1e-4), \
        float(jnp.max(jnp.abs(out_f32 - ref)))

    print("KERNEL_OK")
</pallas_src>

<mosaic_0001>
module attributes {stable_mosaic.version = 11 : i64} {
  func.func @mlp_head_kernel(%arg0: i32, %arg1: memref<16x4x256xbf16, #tpu.memory_space<vmem>>, %arg2: memref<4x512xbf16, #tpu.memory_space<vmem>>, %arg3: memref<1x512xf32, #tpu.memory_space<vmem>>, %arg4: memref<512x128xbf16, #tpu.memory_space<vmem>>, %arg5: memref<1x128xf32, #tpu.memory_space<vmem>>, %arg6: memref<16x128xf32, #tpu.memory_space<vmem>>) attributes {dimension_semantics = [#tpu.dimension_semantics<parallel>], iteration_bounds = array<i64: 1>, scalar_prefetch = 0 : i64, scratch_operands = 0 : i64, tpu.core_type = #tpu.core_type<tc>, window_params = [{transform_indices = @transform_0, window_bounds = array<i64: 16, 4, 256>}, {pipeline_mode = #tpu.pipeline_mode<synchronous>, transform_indices = @transform_1, window_bounds = array<i64: 4, 512>}, {pipeline_mode = #tpu.pipeline_mode<synchronous>, transform_indices = @transform_2, window_bounds = array<i64: 1, 512>}, {pipeline_mode = #tpu.pipeline_mode<synchronous>, transform_indices = @transform_3, window_bounds = array<i64: 512, 128>}, {pipeline_mode = #tpu.pipeline_mode<synchronous>, transform_indices = @transform_4, window_bounds = array<i64: 1, 128>}, {transform_indices = @transform_5, window_bounds = array<i64: 16, 128>}]} {
    %c0 = arith.constant 0 : index
    %c0_0 = arith.constant 0 : index
    %c0_1 = arith.constant 0 : index
    %0 = vector.load %arg1[%c0, %c0_0, %c0_1] : memref<16x4x256xbf16, #tpu.memory_space<vmem>>, vector<16x4x256xbf16>
    %1 = arith.extf %0 : vector<16x4x256xbf16> to vector<16x4x256xf32>
    %cst = arith.constant dense<0.000000e+00> : vector<16x4xf32>
    %2 = vector.multi_reduction <add>, %1, %cst [2] : vector<16x4x256xf32> to vector<16x4xf32>
    %3 = arith.truncf %2 : vector<16x4xf32> to vector<16x4xbf16>
    %c0_2 = arith.constant 0 : index
    %c0_3 = arith.constant 0 : index
    %4 = vector.load %arg2[%c0_2, %c0_3] : memref<4x512xbf16, #tpu.memory_space<vmem>>, vector<4x512xbf16>
    %cst_4 = arith.constant dense<0.000000e+00> : vector<16x512xf32>
    %5 = tpu.matmul %3, %4, %cst_4 {dimension_numbers = #tpu.dot_dimension_numbers<[1], [0], [0], [1], [0, 0, 1, 1], [], []>} : vector<16x4xbf16>, vector<4x512xbf16>, vector<16x512xf32> -> vector<16x512xf32>
    %cst_5 = arith.constant 3.906250e-03 : f32
    %6 = vector.broadcast %cst_5 : f32 to vector<16x512xf32>
    %7 = arith.mulf %5, %6 : vector<16x512xf32>
    %c0_6 = arith.constant 0 : index
    %c0_7 = arith.constant 0 : index
    %8 = vector.load %arg3[%c0_6, %c0_7] : memref<1x512xf32, #tpu.memory_space<vmem>>, vector<1x512xf32>
    %9 = vector.broadcast %8 : vector<1x512xf32> to vector<16x512xf32>
    %10 = arith.addf %7, %9 : vector<16x512xf32>
    %cst_8 = arith.constant 0.000000e+00 : f32
    %11 = vector.broadcast %cst_8 : f32 to vector<16x512xf32>
    %12 = arith.cmpf oge, %10, %11 : vector<16x512xf32>
    %cst_9 = arith.constant 1.500000e-01 : f32
    %13 = vector.broadcast %cst_9 : f32 to vector<16x512xf32>
    %14 = arith.mulf %13, %10 : vector<16x512xf32>
    %15 = arith.select %12, %10, %14 : vector<16x512xi1>, vector<16x512xf32>
    %16 = arith.truncf %15 : vector<16x512xf32> to vector<16x512xbf16>
    %c0_10 = arith.constant 0 : index
    %c0_11 = arith.constant 0 : index
    %17 = vector.load %arg4[%c0_10, %c0_11] : memref<512x128xbf16, #tpu.memory_space<vmem>>, vector<512x128xbf16>
    %cst_12 = arith.constant dense<0.000000e+00> : vector<16x128xf32>
    %18 = tpu.matmul %16, %17, %cst_12 {dimension_numbers = #tpu.dot_dimension_numbers<[1], [0], [0], [1], [0, 0, 1, 1], [], []>} : vector<16x512xbf16>, vector<512x128xbf16>, vector<16x128xf32> -> vector<16x128xf32>
    %c0_13 = arith.constant 0 : index
    %c0_14 = arith.constant 0 : index
    %19 = vector.load %arg5[%c0_13, %c0_14] : memref<1x128xf32, #tpu.memory_space<vmem>>, vector<1x128xf32>
    %20 = vector.broadcast %19 : vector<1x128xf32> to vector<16x128xf32>
    %21 = arith.addf %18, %20 : vector<16x128xf32>
    %c0_15 = arith.constant 0 : index
    %c0_16 = arith.constant 0 : index
    %22 = vector.load %arg6[%c0_15, %c0_16] : memref<16x128xf32, #tpu.memory_space<vmem>>, vector<16x128xf32>
    tpu.vector_store %arg6[%c0_15, %c0_16], %21 {strides = array<i32>} : memref<16x128xf32, #tpu.memory_space<vmem>>, vector<16x128xf32>,
    return
  }
  func.func @transform_0(%arg0: i32) -> (i32, i32, i32) {
    %c0_i32 = arith.constant 0 : i32
    %c0_i32_0 = arith.constant 0 : i32
    %c0_i32_1 = arith.constant 0 : i32
    return %arg0, %c0_i32, %c0_i32_0 : i32, i32, i32
  }
  func.func @transform_1(%arg0: i32) -> (i32, i32) {
    %c0_i32 = arith.constant 0 : i32
    %c0_i32_0 = arith.constant 0 : i32
    %c0_i32_1 = arith.constant 0 : i32
    return %c0_i32, %c0_i32_0 : i32, i32
  }
  func.func @transform_2(%arg0: i32) -> (i32, i32) {
    %c0_i32 = arith.constant 0 : i32
    %c0_i32_0 = arith.constant 0 : i32
    %c0_i32_1 = arith.constant 0 : i32
    return %c0_i32, %c0_i32_0 : i32, i32
  }
  func.func @transform_3(%arg0: i32) -> (i32, i32) {
    %c0_i32 = arith.constant 0 : i32
    %c0_i32_0 = arith.constant 0 : i32
    %c0_i32_1 = arith.constant 0 : i32
    return %c0_i32, %c0_i32_0 : i32, i32
  }
  func.func @transform_4(%arg0: i32) -> (i32, i32) {
    %c0_i32 = arith.constant 0 : i32
    %c0_i32_0 = arith.constant 0 : i32
    %c0_i32_1 = arith.constant 0 : i32
    return %c0_i32, %c0_i32_0 : i32, i32
  }
  func.func @transform_5(%arg0: i32) -> (i32, i32) {
    %c0_i32 = arith.constant 0 : i32
    %c0_i32_0 = arith.constant 0 : i32
    return %arg0, %c0_i32 : i32, i32
  }
}

</mosaic_0001>

<llo_original>
// kernel: tpu_custom_call.1
$region0: #{tpu_custom_call.1}
  #allocation0 [shape = 'u32[]', space=smem, size = 0x4, offset = 0x4, fixed_abs, tag = 'smem constant byte address 0x4 - core index']
  #allocation1 [shape = 'u32[144,128]{1,0:T(1,128)}', space=vmem, size = 0x12000, scoped, tag = 'internal scratch']
  %s0 = inlined_call_operand.hbm [shape: bf16[16,4,256], index: 0, kind: input, shape index: {}]
  %s1 = inlined_call_operand.hbm [shape: bf16[4,512], index: 1, kind: input, shape index: {}]
  %s2 = inlined_call_operand.vmem [shape: f32[1,512], index: 2, kind: input, shape index: {}]
  %s3 = inlined_call_operand.hbm [shape: bf16[512,128], index: 3, kind: input, shape index: {}]
  %s4 = inlined_call_operand.vmem [shape: f32[1,128], index: 4, kind: input, shape index: {}]
  %s5 = inlined_call_operand.hbm [shape: f32[16,128], index: 5, kind: output, shape index: {}]
  %s6 = sld [smem:[#allocation0]]
  $region42: #{tpu_custom_call.1} parent=0
    _
  %s8 = ssub.s32 1, %s6
  %s9 = scalar_select 0, %s8, %s6
  $region1: #{tpu_custom_call.1} parent=0
    #allocation2 [shape = 'u8[32768]{0}', space=vmem, size = 0x8000, scoped, tag = 'input window, operand 0, single buffered']
    #allocation3 [shape = 's32[1]{0}', space=sflag, size = 0x4, scoped, tag = 'scoped memory for tpu_custom_call.1']
    #allocation4 [shape = 's32[1]{0}', space=sflag, size = 0x4, scoped, tag = 'scoped memory for tpu_custom_call.1']
    #allocation5 [shape = 'u8[4096]{0}', space=vmem, size = 0x1000, scoped, tag = 'input window, operand 1, single buffered']
    #allocation6 [shape = 's32[1]{0}', space=sflag, size = 0x4, scoped, tag = 'scoped memory for tpu_custom_call.1']
    #allocation7 [shape = 'u8[131072]{0}', space=vmem, size = 0x20000, scoped, tag = 'input window, operand 3, single buffered']
    #allocation8 [shape = 'u8[8192]{0}', space=vmem, size = 0x2000, scoped, tag = 'output window, operand 0, single buffered']
    %10 = vsyncpa [#allocation3], 0
    %11 = vsyncpa [#allocation6], 0
    %12 = vsyncpa [#allocation4], 0
    // Predicated region
    $region2: #{tpu_custom_call.1} parent=1 // pred_check
      _
    $region3: #{tpu_custom_call.1} parent=1 // pred_check_branch
      %14 = sbr.rel (0) target = $region5
    $region4: #{tpu_custom_call.1} parent=1 // pred_region
      %s16 = ssub.s32 1024, 1024
      %17 = vsyncadd [#allocation3], %s16
      %s18 = sshll.u32 [#allocation2], 4
      %s19 = int_to_ptr.vmem [resolvable:$true] %s18
      %24 = dma.hbm_to_vmem [thread:$0]  %s0, 1024, %s19, [#allocation3], 64, 64, 4
    $region5: #{tpu_custom_call.1} parent=1 // pred_fallthru
      _
    // Predicated region
    $region6: #{tpu_custom_call.1} parent=1 // pred_check
      _
    $region7: #{tpu_custom_call.1} parent=1 // pred_check_branch
      %26 = sbr.rel (0) target = $region9
    $region8: #{tpu_custom_call.1} parent=1 // pred_region
      %s28 = ssub.s32 128, 128
      %29 = vsyncadd [#allocation6], %s28
      %s31 = sshll.u32 [#allocation5], 4
      %s32 = int_to_ptr.vmem [resolvable:$true] %s31
      %34 = dma.hbm_to_vmem [thread:$0]  %s1, 128, %s32, [#allocation6]
    $region9: #{tpu_custom_call.1} parent=1 // pred_fallthru
      _
    // Predicated region
    $region10: #{tpu_custom_call.1} parent=1 // pred_check
      _
    $region11: #{tpu_custom_call.1} parent=1 // pred_check_branch
      %36 = sbr.rel (0) target = $region13
    $region12: #{tpu_custom_call.1} parent=1 // pred_region
      _
    $region13: #{tpu_custom_call.1} parent=1 // pred_fallthru
      _
    // Predicated region
    $region14: #{tpu_custom_call.1} parent=1 // pred_check
      _
    $region15: #{tpu_custom_call.1} parent=1 // pred_check_branch
      %38 = sbr.rel (0) target = $region17
    $region16: #{tpu_custom_call.1} parent=1 // pred_region
      %s40 = ssub.s32 4096, 4096
      %41 = vsyncadd [#allocation6], %s40
      %s42 = sshll.u32 [#allocation7], 4
      %s43 = int_to_ptr.vmem [resolvable:$true] %s42
      %48 = dma.hbm_to_vmem [thread:$0]  %s3, 4096, %s43, [#allocation6], 64, 64, 4
    $region17: #{tpu_custom_call.1} parent=1 // pred_fallthru
      _
    // Predicated region
    $region18: #{tpu_custom_call.1} parent=1 // pred_check
      _
    $region19: #{tpu_custom_call.1} parent=1 // pred_check_branch
      %50 = sbr.rel (0) target = $region21
    $region20: #{tpu_custom_call.1} parent=1 // pred_region
      _
    $region21: #{tpu_custom_call.1} parent=1 // pred_fallthru
      _
    // Predicated region
    $region22: #{tpu_custom_call.1} parent=1 // pred_check
      _
    $region23: #{tpu_custom_call.1} parent=1 // pred_check_branch
      %52 = sbr.rel (0) target = $region25
    $region24: #{tpu_custom_call.1} parent=1 // pred_region
      %53 = dma.done [#allocation3], 1024
    $region25: #{tpu_custom_call.1} parent=1 // pred_fallthru
      _
    // Predicated region
    $region26: #{tpu_custom_call.1} parent=1 // pred_check
      _
    $region27: #{tpu_custom_call.1} parent=1 // pred_check_branch
      %55 = sbr.rel (0) target = $region29
    $region28: #{tpu_custom_call.1} parent=1 // pred_region
      %56 = dma.done [#allocation6], 128
    $region29: #{tpu_custom_call.1} parent=1 // pred_fallthru
      _
    // Predicated region
    $region30: #{tpu_custom_call.1} parent=1 // pred_check
      _
    $region31: #{tpu_custom_call.1} parent=1 // pred_check_branch
      %58 = sbr.rel (0) target = $region33
    $region32: #{tpu_custom_call.1} parent=1 // pred_region
      %59 = dma.done [#allocation6], 4096
    $region33: #{tpu_custom_call.1} parent=1 // pred_fallthru
      _
    %v61 = vld [vmem:[#allocation2] sm:$0xf]
    %v62 = vld [vmem:[#allocation2 + $0x4] sm:$0xf]
    %v63 = vld [vmem:[#allocation2 + $0x8] sm:$0xf]
    %v64 = vld [vmem:[#allocation2 + $0xc] sm:$0xf]
    %v65 = vld [vmem:[#allocation2 + $0x10] sm:$0xf]
    %v66 = vld [vmem:[#allocation2 + $0x14] sm:$0xf]
    %v67 = vld [vmem:[#allocation2 + $0x18] sm:$0xf]
    %v68 = vld [vmem:[#allocation2 + $0x1c] sm:$0xf]
    %v69 = vld [vmem:[#allocation2 + $0x20] sm:$0xf]
    %v70 = vld [vmem:[#allocation2 + $0x24] sm:$0xf]
    %v71 = vld [vmem:[#allocation2 + $0x28] sm:$0xf]
    %v72 = vld [vmem:[#allocation2 + $0x2c] sm:$0xf]
    %v73 = vld [vmem:[#allocation2 + $0x30] sm:$0xf]
    %v74 = vld [vmem:[#allocation2 + $0x34] sm:$0xf]
    %v75 = vld [vmem:[#allocation2 + $0x38] sm:$0xf]
    %v76 = vld [vmem:[#allocation2 + $0x3c] sm:$0xf]
    %v77 = vunpack.c.l.bf16 %v61
    %v78 = vunpack.c.l.bf16 %v62
    %v79 = vunpack.c.l.bf16 %v63
    %v80 = vunpack.c.l.bf16 %v64
    %v81 = vunpack.c.l.bf16 %v65
    %v82 = vunpack.c.l.bf16 %v66
    %v83 = vunpack.c.l.bf16 %v67
    %v84 = vunpack.c.l.bf16 %v68
    %v85 = vunpack.c.l.bf16 %v69
    %v86 = vunpack.c.l.bf16 %v70
    %v87 = vunpack.c.l.bf16 %v71
    %v88 = vunpack.c.l.bf16 %v72
    %v89 = vunpack.c.l.bf16 %v73
    %v90 = vunpack.c.l.bf16 %v74
    %v91 = vunpack.c.l.bf16 %v75
    %v92 = vunpack.c.l.bf16 %v76
    %v109 = vcombine.high %v77, %v77
    %v110 = vcombine.high %v78, %v78
    %v111 = vcombine.high %v79, %v79
    %v112 = vcombine.high %v80, %v80
    %v113 = vcombine.high %v81, %v81
    %v114 = vcombine.high %v82, %v82
    %v115 = vcombine.high %v83, %v83
    %v116 = vcombine.high %v84, %v84
    %v117 = vcombine.high %v85, %v85
    %v118 = vcombine.high %v86, %v86
    %v119 = vcombine.high %v87, %v87
    %v120 = vcombine.high %v88, %v88
    %v121 = vcombine.high %v89, %v89
    %v122 = vcombine.high %v90, %v90
    %v123 = vcombine.high %v91, %v91
    %v124 = vcombine.high %v92, %v92
    %vm141 = vcmask 1043456
    %v142 = vsel %vm141, %v77, 0.0
    %v143 = vsel %vm141, %v109, 0.0
    %v144 = vadd.f32 %v142, %v143
    %145 = vadd.xlane.f32.xlu0 %v144
    %v146 = vpop.xlane.xlu0 %145
    %v147 = vsel %vm141, %v78, 0.0
    %v148 = vsel %vm141, %v110, 0.0
    %v149 = vadd.f32 %v147, %v148
    %150 = vadd.xlane.f32.xlu0 %v149
    %v151 = vpop.xlane.xlu0 %150
    %v152 = vsel %vm141, %v79, 0.0
    %v153 = vsel %vm141, %v111, 0.0
    %v154 = vadd.f32 %v152, %v153
    %155 = vadd.xlane.f32.xlu0 %v154
    %v156 = vpop.xlane.xlu0 %155
    %v157 = vsel %vm141, %v80, 0.0
    %v158 = vsel %vm141, %v112, 0.0
    %v159 = vadd.f32 %v157, %v158
    %160 = vadd.xlane.f32.xlu0 %v159
    %v161 = vpop.xlane.xlu0 %160
    %v162 = vsel %vm141, %v81, 0.0
    %v163 = vsel %vm141, %v113, 0.0
    %v164 = vadd.f32 %v162, %v163
    %165 = vadd.xlane.f32.xlu0 %v164
    %v166 = vpop.xlane.xlu0 %165
    %v167 = vsel %vm141, %v82, 0.0
    %v168 = vsel %vm141, %v114, 0.0
    %v169 = vadd.f32 %v167, %v168
    %170 = vadd.xlane.f32.xlu0 %v169
    %v171 = vpop.xlane.xlu0 %170
    %v172 = vsel %vm141, %v83, 0.0
    %v173 = vsel %vm141, %v115, 0.0
    %v174 = vadd.f32 %v172, %v173
    %175 = vadd.xlane.f32.xlu0 %v174
    %v176 = vpop.xlane.xlu0 %175
    %v177 = vsel %vm141, %v84, 0.0
    %v178 = vsel %vm141, %v116, 0.0
    %v179 = vadd.f32 %v177, %v178
    %180 = vadd.xlane.f32.xlu0 %v179
    %v181 = vpop.xlane.xlu0 %180
    %v182 = vsel %vm141, %v85, 0.0
    %v183 = vsel %vm141, %v117, 0.0
    %v184 = vadd.f32 %v182, %v183
    %185 = vadd.xlane.f32.xlu0 %v184
    %v186 = vpop.xlane.xlu0 %185
    %v187 = vsel %vm141, %v86, 0.0
    %v188 = vsel %vm141, %v118, 0.0
    %v189 = vadd.f32 %v187, %v188
    %190 = vadd.xlane.f32.xlu0 %v189
    %v191 = vpop.xlane.xlu0 %190
    %v192 = vsel %vm141, %v87, 0.0
    %v193 = vsel %vm141, %v119, 0.0
    %v194 = vadd.f32 %v192, %v193
    %195 = vadd.xlane.f32.xlu0 %v194
    %v196 = vpop.xlane.xlu0 %195
    %v197 = vsel %vm141, %v88, 0.0
    %v198 = vsel %vm141, %v120, 0.0
    %v199 = vadd.f32 %v197, %v198
    %200 = vadd.xlane.f32.xlu0 %v199
    %v201 = vpop.xlane.xlu0 %200
    %v202 = vsel %vm141, %v89, 0.0
    %v203 = vsel %vm141, %v121, 0.0
    %v204 = vadd.f32 %v202, %v203
    %205 = vadd.xlane.f32.xlu0 %v204
    %v206 = vpop.xlane.xlu0 %205
    %v207 = vsel %vm141, %v90, 0.0
    %v208 = vsel %vm141, %v122, 0.0
    %v209 = vadd.f32 %v207, %v208
    %210 = vadd.xlane.f32.xlu0 %v209
    %v211 = vpop.xlane.xlu0 %210
    %v212 = vsel %vm141, %v91, 0.0
    %v213 = vsel %vm141, %v123, 0.0
    %v214 = vadd.f32 %v212, %v213
    %215 = vadd.xlane.f32.xlu0 %v214
    %v216 = vpop.xlane.xlu0 %215
    %v217 = vsel %vm141, %v92, 0.0
    %v218 = vsel %vm141, %v124, 0.0
    %v219 = vadd.f32 %v217, %v218
    %220 = vadd.xlane.f32.xlu0 %v219
    %v221 = vpop.xlane.xlu0 %220
    %v222 = vpack.c.bf16 %v146, %v146
    %v223 = vpack.c.bf16 %v151, %v151
    %v224 = vpack.c.bf16 %v156, %v156
    %v225 = vpack.c.bf16 %v161, %v161
    %v226 = vpack.c.bf16 %v166, %v166
    %v227 = vpack.c.bf16 %v171, %v171
    %v228 = vpack.c.bf16 %v176, %v176
    %v229 = vpack.c.bf16 %v181, %v181
    %v230 = vpack.c.bf16 %v186, %v186
    %v231 = vpack.c.bf16 %v191, %v191
    %v232 = vpack.c.bf16 %v196, %v196
    %v233 = vpack.c.bf16 %v201, %v201
    %v234 = vpack.c.bf16 %v206, %v206
    %v235 = vpack.c.bf16 %v211, %v211
    %v236 = vpack.c.bf16 %v216, %v216
    %v237 = vpack.c.bf16 %v221, %v221
    %v238 = vld [vmem:[#allocation5] sm:$0xff]
    %v255 = vunpack.c.l.b16 %v222
    %v256 = vunpack.c.l.b16 %v223
    %v257 = vunpack.c.l.b16 %v224
    %v258 = vunpack.c.l.b16 %v225
    %v259 = vunpack.c.l.b16 %v226
    %v260 = vunpack.c.l.b16 %v227
    %v261 = vunpack.c.l.b16 %v228
    %v262 = vunpack.c.l.b16 %v229
    %v263 = vunpack.c.l.b16 %v230
    %v264 = vunpack.c.l.b16 %v231
    %v265 = vunpack.c.l.b16 %v232
    %v266 = vunpack.c.l.b16 %v233
    %v267 = vunpack.c.l.b16 %v234
    %v268 = vunpack.c.l.b16 %v235
    %v269 = vunpack.c.l.b16 %v236
    %v270 = vunpack.c.l.b16 %v237
    %v271 = vlaneseq
    %v272 = vand.u32 %v271, 127
    %v273 = vlaneseq
    %v274 = vshrl.u32 %v273, 7
    %v275 = vsub.s32 %v272, %v274
    %v276 = vrot.slane %v255, %v275
    %v277 = vlaneseq
    %v278 = vshrl.u32 %v277, 7
    %v279 = vsub.s32 %v272, %v278
    %v280 = vrot.slane %v256, %v279
    %v281 = vlaneseq
    %v282 = vshrl.u32 %v281, 7
    %v283 = vsub.s32 %v272, %v282
    %v284 = vrot.slane %v257, %v283
    %v285 = vlaneseq
    %v286 = vshrl.u32 %v285, 7
    %v287 = vsub.s32 %v272, %v286
    %v288 = vrot.slane %v258, %v287
    %v289 = vlaneseq
    %v290 = vshrl.u32 %v289, 7
    %v291 = vsub.s32 %v272, %v290
    %v292 = vrot.slane %v259, %v291
    %v293 = vlaneseq
    %v294 = vshrl.u32 %v293, 7
    %v295 = vsub.s32 %v272, %v294
    %v296 = vrot.slane %v260, %v295
    %v297 = vlaneseq
    %v298 = vshrl.u32 %v297, 7
    %v299 = vsub.s32 %v272, %v298
    %v300 = vrot.slane %v261, %v299
    %v301 = vlaneseq
    %v302 = vshrl.u32 %v301, 7
    %v303 = vsub.s32 %v272, %v302
    %v304 = vrot.slane %v262, %v303
    %v305 = vlaneseq
    %v306 = vshrl.u32 %v305, 7
    %v307 = vsub.s32 %v272, %v306
    %v308 = vrot.slane %v263, %v307
    %v309 = vlaneseq
    %v310 = vshrl.u32 %v309, 7
    %v311 = vsub.s32 %v272, %v310
    %v312 = vrot.slane %v264, %v311
    %v313 = vlaneseq
    %v314 = vshrl.u32 %v313, 7
    %v315 = vsub.s32 %v272, %v314
    %v316 = vrot.slane %v265, %v315
    %v317 = vlaneseq
    %v318 = vshrl.u32 %v317, 7
    %v319 = vsub.s32 %v272, %v318
    %v320 = vrot.slane %v266, %v319
    %v321 = vlaneseq
    %v322 = vshrl.u32 %v321, 7
    %v323 = vsub.s32 %v272, %v322
    %v324 = vrot.slane %v267, %v323
    %v325 = vlaneseq
    %v326 = vshrl.u32 %v325, 7
    %v327 = vsub.s32 %v272, %v326
    %v328 = vrot.slane %v268, %v327
    %v329 = vlaneseq
    %v330 = vshrl.u32 %v329, 7
    %v331 = vsub.s32 %v272, %v330
    %v332 = vrot.slane %v269, %v331
    %v333 = vlaneseq
    %v334 = vshrl.u32 %v333, 7
    %v335 = vsub.s32 %v272, %v334
    %v336 = vrot.slane %v270, %v335
    %vm337 = vcmask 1041409
    %v338 = vsel %vm337, %v280, %v276
    %vm339 = vcmask 1042434
    %v340 = vsel %vm339, %v284, %v338
    %vm341 = vcmask 1043459
    %v342 = vsel %vm341, %v288, %v340
    %vm343 = vcmask 1044484
    %v344 = vsel %vm343, %v292, %v342
    %vm345 = vcmask 1045509
    %v346 = vsel %vm345, %v296, %v344
    %vm347 = vcmask 1046534
    %v348 = vsel %vm347, %v300, %v346
    %vm349 = vcmask 1047559
    %v350 = vsel %vm349, %v304, %v348
    %v351 = vsel %vm337, %v312, %v308
    %v352 = vsel %vm339, %v316, %v351
    %v353 = vsel %vm341, %v320, %v352
    %v354 = vsel %vm343, %v324, %v353
    %v355 = vsel %vm345, %v328, %v354
    %v356 = vsel %vm347, %v332, %v355
    %v357 = vsel %vm349, %v336, %v356
    %v358 = vpack.c.b16 %v357, %v350
    %v360 = vcombine.high %v238, %v238
    %v362 = vunpack.c.l.s4 1983009808
    %v363 = vunpack.c.0.s8 %v362
    %v364 = vlaneseq
    %v365 = vshrl.u32 %v364, 7
    %v366 = vsub.s32 %v363, %v365
    %v367 = vrot.slane %v238, %v366
    %v369 = vunpack.c.l.s4 1983009808
    %v370 = vunpack.c.0.s8 %v369
    %v371 = vlaneseq
    %v372 = vshrl.u32 %v371, 7
    %v373 = vsub.s32 %v370, %v372
    %v374 = vrot.slane %v360, %v373
    %v375 = vcombine.high %v367, %v367
    %v376 = vcombine.high %v374, %v374
    %vm377 = vcmask 31744
    %v379 = vsel %vm377, %v358, 0
    %vm381 = vcmask 1041408
    %v383 = vsel %vm381, %v367, 0
    %v386 = vsel %vm381, %v375, 0
    %v389 = vsel %vm381, %v374, 0
    %v392 = vsel %vm381, %v376, 0
    %394 = vmatprep.subr.bf16.mxu0 %v386
    %395 = vmatpush1.bf16.msra.mxu0 %v383
    %396 = vmatprep.subr.bf16.mxu0 0
    %397 = vmatpush1.bf16.msra.mxu0 0
    %398 = vmatprep.subr.bf16.mxu0 0
    %399 = vmatpush1.bf16.msra.mxu0 0
    %400 = vmatprep.subr.bf16.mxu0 0
    %401 = vmatpush1.bf16.msra.mxu0 0
    %402 = vmatprep.subr.bf16.mxu0 0
    %403 = vmatpush1.bf16.msra.mxu0 0
    %404 = vmatprep.subr.bf16.mxu0 0
    %405 = vmatpush1.bf16.msra.mxu0 0
    %406 = vmatprep.subr.bf16.mxu0 0
    %407 = vmatpush1.bf16.msra.mxu0 0
    %408 = vmatprep.subr.bf16.mxu0 0
    %409 = vmatpush1.bf16.msra.mxu0 0
    %410 = vmatprep.subr.bf16.mxu0 0
    %411 = vmatpush1.bf16.msra.mxu0 0
    %412 = vmatprep.subr.bf16.mxu0 0
    %413 = vmatpush1.bf16.msra.mxu0 0
    %414 = vmatprep.subr.bf16.mxu0 0
    %415 = vmatpush1.bf16.msra.mxu0 0
    %416 = vmatprep.subr.bf16.mxu0 0
    %417 = vmatpush1.bf16.msra.mxu0 0
    %418 = vmatprep.subr.bf16.mxu0 0
    %419 = vmatpush1.bf16.msra.mxu0 0
    %420 = vmatprep.subr.bf16.mxu0 0
    %421 = vmatpush1.bf16.msra.mxu0 0
    %422 = vmatprep.subr.bf16.mxu0 0
    %423 = vmatpush1.bf16.msra.mxu0 0
    %424 = vmatprep.subr.bf16.mxu0 0
    %425 = vmatpush1.bf16.msra.mxu0 0
    %426 = vmatprep.mubr.bf16.mxu0 0
    %427 = vmatmul.mubr.bf16.gmra.mrb[0].mxu0 %v379
    %v428 = vpop.f32.mrb[0].mxu0
    %v429 = vadd.f32 0.0, %v428
    %v430 = vpop.f32.mrb[0].mxu0
    %v431 = vadd.f32 0.0, %v430
    %v432 = vpop.f32.mrb[0].mxu0
    %v433 = vadd.f32 0.0, %v432
    %v434 = vpop.f32.mrb[0].mxu0
    %v435 = vadd.f32 0.0, %v434
    %436 = vdwg.mxu0
    %437 = vmatprep.subr.bf16.mxu0 %v392
    %438 = vmatpush1.bf16.msra.mxu0 %v389
    %439 = vmatprep.subr.bf16.mxu0 0
    %440 = vmatpush1.bf16.msra.mxu0 0
    %441 = vmatprep.subr.bf16.mxu0 0
    %442 = vmatpush1.bf16.msra.mxu0 0
    %443 = vmatprep.subr.bf16.mxu0 0
    %444 = vmatpush1.bf16.msra.mxu0 0
    %445 = vmatprep.subr.bf16.mxu0 0
    %446 = vmatpush1.bf16.msra.mxu0 0
    %447 = vmatprep.subr.bf16.mxu0 0
    %448 = vmatpush1.bf16.msra.mxu0 0
    %449 = vmatprep.subr.bf16.mxu0 0
    %450 = vmatpush1.bf16.msra.mxu0 0
    %451 = vmatprep.subr.bf16.mxu0 0
    %452 = vmatpush1.bf16.msra.mxu0 0
    %453 = vmatprep.subr.bf16.mxu0 0
    %454 = vmatpush1.bf16.msra.mxu0 0
    %455 = vmatprep.subr.bf16.mxu0 0
    %456 = vmatpush1.bf16.msra.mxu0 0
    %457 = vmatprep.subr.bf16.mxu0 0
    %458 = vmatpush1.bf16.msra.mxu0 0
    %459 = vmatprep.subr.bf16.mxu0 0
    %460 = vmatpush1.bf16.msra.mxu0 0
    %461 = vmatprep.subr.bf16.mxu0 0
    %462 = vmatpush1.bf16.msra.mxu0 0
    %463 = vmatprep.subr.bf16.mxu0 0
    %464 = vmatpush1.bf16.msra.mxu0 0
    %465 = vmatprep.subr.bf16.mxu0 0
    %466 = vmatpush1.bf16.msra.mxu0 0
    %467 = vmatprep.subr.bf16.mxu0 0
    %468 = vmatpush1.bf16.msra.mxu0 0
    %469 = vmatprep.mubr.bf16.mxu0 0
    %470 = vmatmul.mubr.bf16.gmra.mrb[0].mxu0 %v379
    %v471 = vpop.f32.mrb[0].mxu0
    %v472 = vadd.f32 0.0, %v471
    %v473 = vpop.f32.mrb[0].mxu0
    %v474 = vadd.f32 0.0, %v473
    %v475 = vpop.f32.mrb[0].mxu0
    %v476 = vadd.f32 0.0, %v475
    %v477 = vpop.f32.mrb[0].mxu0
    %v478 = vadd.f32 0.0, %v477
    %479 = vdwg.mxu0
    %v480 = vmul.f32 %v429, 0.00390625
    %v481 = vmul.f32 %v431, 0.00390625
    %v482 = vmul.f32 %v472, 0.00390625
    %v483 = vmul.f32 %v474, 0.00390625
    %v484 = vmul.f32 %v433, 0.00390625
    %v485 = vmul.f32 %v435, 0.00390625
    %v486 = vmul.f32 %v476, 0.00390625
    %v487 = vmul.f32 %v478, 0.00390625
    %v488 = vld [vmem:[%s2] sm:$0xf]
    %v490 = vlaneseq
    %v491 = vshrl.u32 %v490, 7
    %v492 = vsub.s32 0, %v491
    %v493 = vrot.slane %v488, %v492
    %v494 = vlaneseq
    %v495 = vshrl.u32 %v494, 7
    %v496 = vsub.s32 1, %v495
    %v497 = vrot.slane %v488, %v496
    %v498 = vlaneseq
    %v499 = vshrl.u32 %v498, 7
    %v500 = vsub.s32 2, %v499
    %v501 = vrot.slane %v488, %v500
    %v502 = vlaneseq
    %v503 = vshrl.u32 %v502, 7
    %v504 = vsub.s32 3, %v503
    %v505 = vrot.slane %v488, %v504
    %v510 = vadd.f32 %v480, %v493
    %v511 = vadd.f32 %v481, %v497
    %v512 = vadd.f32 %v482, %v501
    %v513 = vadd.f32 %v483, %v505
    %v514 = vadd.f32 %v484, %v493
    %v515 = vadd.f32 %v485, %v497
    %v516 = vadd.f32 %v486, %v501
    %v517 = vadd.f32 %v487, %v505
    %vm518 = vcmp.ge.f32.partialorder %v510, 0.0
    %vm519 = vcmp.ge.f32.partialorder %v511, 0.0
    %vm520 = vcmp.ge.f32.partialorder %v512, 0.0
    %vm521 = vcmp.ge.f32.partialorder %v513, 0.0
    %vm522 = vcmp.ge.f32.partialorder %v514, 0.0
    %vm523 = vcmp.ge.f32.partialorder %v515, 0.0
    %vm524 = vcmp.ge.f32.partialorder %v516, 0.0
    %vm525 = vcmp.ge.f32.partialorder %v517, 0.0
    %v526 = vmul.f32 %v510, 0.15
    %v527 = vmul.f32 %v511, 0.15
    %v528 = vmul.f32 %v512, 0.15
    %v529 = vmul.f32 %v513, 0.15
    %v530 = vmul.f32 %v514, 0.15
    %v531 = vmul.f32 %v515, 0.15
    %v532 = vmul.f32 %v516, 0.15
    %v533 = vmul.f32 %v517, 0.15
    %v534 = vsel %vm518, %v510, %v526
    %v535 = vsel %vm519, %v511, %v527
    %v536 = vsel %vm520, %v512, %v528
    %v537 = vsel %vm521, %v513, %v529
    %v538 = vsel %vm522, %v514, %v530
    %v539 = vsel %vm523, %v515, %v531
    %v540 = vsel %vm524, %v516, %v532
    %v541 = vsel %vm525, %v517, %v533
    %v542 = vpack.c.bf16 %v538, %v534
    %v543 = vpack.c.bf16 %v539, %v535
    %v544 = vpack.c.bf16 %v540, %v536
    %v545 = vpack.c.bf16 %v541, %v537
    %v546 = vld [vmem:[#allocation7] sm:$0xf]
    %v547 = vld [vmem:[#allocation7 + $0x4] sm:$0xf]
    %v548 = vld [vmem:[#allocation7 + $0x8] sm:$0xf]
    %v549 = vld [vmem:[#allocation7 + $0xc] sm:$0xf]
    %v550 = vld [vmem:[#allocation7 + $0x10] sm:$0xf]
    %v551 = vld [vmem:[#allocation7 + $0x14] sm:$0xf]
    %v552 = vld [vmem:[#allocation7 + $0x18] sm:$0xf]
    %v553 = vld [vmem:[#allocation7 + $0x1c] sm:$0xf]
    %v554 = vld [vmem:[#allocation7 + $0x20] sm:$0xf]
    %v555 = vld [vmem:[#allocation7 + $0x24] sm:$0xf]
    %v556 = vld [vmem:[#allocation7 + $0x28] sm:$0xf]
    %v557 = vld [vmem:[#allocation7 + $0x2c] sm:$0xf]
    %v558 = vld [vmem:[#allocation7 + $0x30] sm:$0xf]
    %v559 = vld [vmem:[#allocation7 + $0x34] sm:$0xf]
    %v560 = vld [vmem:[#allocation7 + $0x38] sm:$0xf]
    %v561 = vld [vmem:[#allocation7 + $0x3c] sm:$0xf]
    %v562 = vld [vmem:[#allocation7 + $0x40] sm:$0xf]
    %v563 = vld [vmem:[#allocation7 + $0x44] sm:$0xf]
    %v564 = vld [vmem:[#allocation7 + $0x48] sm:$0xf]
    %v565 = vld [vmem:[#allocation7 + $0x4c] sm:$0xf]
    %v566 = vld [vmem:[#allocation7 + $0x50] sm:$0xf]
    %v567 = vld [vmem:[#allocation7 + $0x54] sm:$0xf]
    %v568 = vld [vmem:[#allocation7 + $0x58] sm:$0xf]
    %v569 = vld [vmem:[#allocation7 + $0x5c] sm:$0xf]
    %v570 = vld [vmem:[#allocation7 + $0x60] sm:$0xf]
    %v571 = vld [vmem:[#allocation7 + $0x64] sm:$0xf]
    %v572 = vld [vmem:[#allocation7 + $0x68] sm:$0xf]
    %v573 = vld [vmem:[#allocation7 + $0x6c] sm:$0xf]
    %v574 = vld [vmem:[#allocation7 + $0x70] sm:$0xf]
    %v575 = vld [vmem:[#allocation7 + $0x74] sm:$0xf]
    %v576 = vld [vmem:[#allocation7 + $0x78] sm:$0xf]
    %v577 = vld [vmem:[#allocation7 + $0x7c] sm:$0xf]
    %v578 = vld [vmem:[#allocation7 + $0x80] sm:$0xf]
    %v579 = vld [vmem:[#allocation7 + $0x84] sm:$0xf]
    %v580 = vld [vmem:[#allocation7 + $0x88] sm:$0xf]
    %v581 = vld [vmem:[#allocation7 + $0x8c] sm:$0xf]
    %v582 = vld [vmem:[#allocation7 + $0x90] sm:$0xf]
    %v583 = vld [vmem:[#allocation7 + $0x94] sm:$0xf]
    %v584 = vld [vmem:[#allocation7 + $0x98] sm:$0xf]
    %v585 = vld [vmem:[#allocation7 + $0x9c] sm:$0xf]
    %v586 = vld [vmem:[#allocation7 + $0xa0] sm:$0xf]
    %v587 = vld [vmem:[#allocation7 + $0xa4] sm:$0xf]
    %v588 = vld [vmem:[#allocation7 + $0xa8] sm:$0xf]
    %v589 = vld [vmem:[#allocation7 + $0xac] sm:$0xf]
    %v590 = vld [vmem:[#allocation7 + $0xb0] sm:$0xf]
    %v591 = vld [vmem:[#allocation7 + $0xb4] sm:$0xf]
    %v592 = vld [vmem:[#allocation7 + $0xb8] sm:$0xf]
    %v593 = vld [vmem:[#allocation7 + $0xbc] sm:$0xf]
    %v594 = vld [vmem:[#allocation7 + $0xc0] sm:$0xf]
    %v595 = vld [vmem:[#allocation7 + $0xc4] sm:$0xf]
    %v596 = vld [vmem:[#allocation7 + $0xc8] sm:$0xf]
    %v597 = vld [vmem:[#allocation7 + $0xcc] sm:$0xf]
    %v598 = vld [vmem:[#allocation7 + $0xd0] sm:$0xf]
    %v599 = vld [vmem:[#allocation7 + $0xd4] sm:$0xf]
    %v600 = vld [vmem:[#allocation7 + $0xd8] sm:$0xf]
    %v601 = vld [vmem:[#allocation7 + $0xdc] sm:$0xf]
    %v602 = vld [vmem:[#allocation7 + $0xe0] sm:$0xf]
    %v603 = vld [vmem:[#allocation7 + $0xe4] sm:$0xf]
    %v604 = vld [vmem:[#allocation7 + $0xe8] sm:$0xf]
    %v605 = vld [vmem:[#allocation7 + $0xec] sm:$0xf]
    %v606 = vld [vmem:[#allocation7 + $0xf0] sm:$0xf]
    %v607 = vld [vmem:[#allocation7 + $0xf4] sm:$0xf]
    %v608 = vld [vmem:[#allocation7 + $0xf8] sm:$0xf]
    %v609 = vld [vmem:[#allocation7 + $0xfc] sm:$0xf]
    %v610 = vld [vmem:[%s4] sm:$0x1]
    %v612 = vlaneseq
    %v613 = vshrl.u32 %v612, 7
    %v614 = vsub.s32 0, %v613
    %v615 = vrot.slane %v610, %v614
    %v681 = vunpack.c.l.b16 %v546
    %v682 = vunpack.c.l.b16 %v547
    %v683 = vunpack.c.l.b16 %v548
    %v684 = vunpack.c.l.b16 %v549
    %v685 = vunpack.c.l.b16 %v550
    %v686 = vunpack.c.l.b16 %v551
    %v687 = vunpack.c.l.b16 %v552
    %v688 = vunpack.c.l.b16 %v553
    %v689 = vunpack.c.l.b16 %v554
    %v690 = vunpack.c.l.b16 %v555
    %v691 = vunpack.c.l.b16 %v556
    %v692 = vunpack.c.l.b16 %v557
    %v693 = vunpack.c.l.b16 %v558
    %v694 = vunpack.c.l.b16 %v559
    %v695 = vunpack.c.l.b16 %v560
    %v696 = vunpack.c.l.b16 %v561
    %v697 = vunpack.c.l.b16 %v562
    %v698 = vunpack.c.l.b16 %v563
    %v699 = vunpack.c.l.b16 %v564
    %v700 = vunpack.c.l.b16 %v565
    %v701 = vunpack.c.l.b16 %v566
    %v702 = vunpack.c.l.b16 %v567
    %v703 = vunpack.c.l.b16 %v568
    %v704 = vunpack.c.l.b16 %v569
    %v705 = vunpack.c.l.b16 %v570
    %v706 = vunpack.c.l.b16 %v571
    %v707 = vunpack.c.l.b16 %v572
    %v708 = vunpack.c.l.b16 %v573
    %v709 = vunpack.c.l.b16 %v574
    %v710 = vunpack.c.l.b16 %v575
    %v711 = vunpack.c.l.b16 %v576
    %v712 = vunpack.c.l.b16 %v577
    %v713 = vunpack.c.l.b16 %v578
    %v714 = vunpack.c.l.b16 %v579
    %v715 = vunpack.c.l.b16 %v580
    %v716 = vunpack.c.l.b16 %v581
    %v717 = vunpack.c.l.b16 %v582
    %v718 = vunpack.c.l.b16 %v583
    %v719 = vunpack.c.l.b16 %v584
    %v720 = vunpack.c.l.b16 %v585
    %v721 = vunpack.c.l.b16 %v586
    %v722 = vunpack.c.l.b16 %v587
    %v723 = vunpack.c.l.b16 %v588
    %v724 = vunpack.c.l.b16 %v589
    %v725 = vunpack.c.l.b16 %v590
    %v726 = vunpack.c.l.b16 %v591
    %v727 = vunpack.c.l.b16 %v592
    %v728 = vunpack.c.l.b16 %v593
    %v729 = vunpack.c.l.b16 %v594
    %v730 = vunpack.c.l.b16 %v595
    %v731 = vunpack.c.l.b16 %v596
    %v732 = vunpack.c.l.b16 %v597
    %v733 = vunpack.c.l.b16 %v598
    %v734 = vunpack.c.l.b16 %v599
    %v735 = vunpack.c.l.b16 %v600
    %v736 = vunpack.c.l.b16 %v601
    %v737 = vunpack.c.l.b16 %v602
    %v738 = vunpack.c.l.b16 %v603
    %v739 = vunpack.c.l.b16 %v604
    %v740 = vunpack.c.l.b16 %v605
    %v741 = vunpack.c.l.b16 %v606
    %v742 = vunpack.c.l.b16 %v607
    %v743 = vunpack.c.l.b16 %v608
    %v744 = vunpack.c.l.b16 %v609
    %v745 = vpack.c.b16 %v682, %v681
    %v746 = vpack.c.b16 %v684, %v683
    %v747 = vpack.c.b16 %v686, %v685
    %v748 = vpack.c.b16 %v688, %v687
    %v749 = vpack.c.b16 %v690, %v689
    %v750 = vpack.c.b16 %v692, %v691
    %v751 = vpack.c.b16 %v694, %v693
    %v752 = vpack.c.b16 %v696, %v695
    %v753 = vpack.c.b16 %v698, %v697
    %v754 = vpack.c.b16 %v700, %v699
    %v755 = vpack.c.b16 %v702, %v701
    %v756 = vpack.c.b16 %v704, %v703
    %v757 = vpack.c.b16 %v706, %v705
    %v758 = vpack.c.b16 %v708, %v707
    %v759 = vpack.c.b16 %v710, %v709
    %v760 = vpack.c.b16 %v712, %v711
    %v761 = vpack.c.b16 %v714, %v713
    %v762 = vpack.c.b16 %v716, %v715
    %v763 = vpack.c.b16 %v718, %v717
    %v764 = vpack.c.b16 %v720, %v719
    %v765 = vpack.c.b16 %v722, %v721
    %v766 = vpack.c.b16 %v724, %v723
    %v767 = vpack.c.b16 %v726, %v725
    %v768 = vpack.c.b16 %v728, %v727
    %v769 = vpack.c.b16 %v730, %v729
    %v770 = vpack.c.b16 %v732, %v731
    %v771 = vpack.c.b16 %v734, %v733
    %v772 = vpack.c.b16 %v736, %v735
    %v773 = vpack.c.b16 %v738, %v737
    %v774 = vpack.c.b16 %v740, %v739
    %v775 = vpack.c.b16 %v742, %v741
    %v776 = vpack.c.b16 %v744, %v743
    %809 = vmatprep.subr.bf16.mxu0 0
    %810 = vmatpush1.bf16.msra.mxu0 %v745
    %811 = vmatprep.subr.bf16.mxu0 0
    %812 = vmatpush1.bf16.msra.mxu0 %v746
    %813 = vmatprep.subr.bf16.mxu0 0
    %814 = vmatpush1.bf16.msra.mxu0 %v747
    %815 = vmatprep.subr.bf16.mxu0 0
    %816 = vmatpush1.bf16.msra.mxu0 %v748
    %817 = vmatprep.subr.bf16.mxu0 0
    %818 = vmatpush1.bf16.msra.mxu0 %v749
    %819 = vmatprep.subr.bf16.mxu0 0
    %820 = vmatpush1.bf16.msra.mxu0 %v750
    %821 = vmatprep.subr.bf16.mxu0 0
    %822 = vmatpush1.bf16.msra.mxu0 %v751
    %823 = vmatprep.subr.bf16.mxu0 0
    %824 = vmatpush1.bf16.msra.mxu0 %v752
    %825 = vmatprep.subr.bf16.mxu0 0
    %826 = vmatpush1.bf16.msra.mxu0 %v753
    %827 = vmatprep.subr.bf16.mxu0 0
    %828 = vmatpush1.bf16.msra.mxu0 %v754
    %829 = vmatprep.subr.bf16.mxu0 0
    %830 = vmatpush1.bf16.msra.mxu0 %v755
    %831 = vmatprep.subr.bf16.mxu0 0
    %832 = vmatpush1.bf16.msra.mxu0 %v756
    %833 = vmatprep.subr.bf16.mxu0 0
    %834 = vmatpush1.bf16.msra.mxu0 %v757
    %835 = vmatprep.subr.bf16.mxu0 0
    %836 = vmatpush1.bf16.msra.mxu0 %v758
    %837 = vmatprep.subr.bf16.mxu0 0
    %838 = vmatpush1.bf16.msra.mxu0 %v759
    %839 = vmatprep.subr.bf16.mxu0 0
    %840 = vmatpush1.bf16.msra.mxu0 %v760
    %841 = vmatprep.mubr.bf16.mxu0 %v543
    %842 = vmatmul.mubr.bf16.gmra.mrb[0].mxu0 %v542
    %v843 = vpop.f32.mrb[0].mxu0
    %v844 = vadd.f32 %v615, %v843
    %v845 = vpop.f32.mrb[0].mxu0
    %v846 = vpop.f32.mrb[0].mxu0
    %v847 = vadd.f32 %v615, %v846
    %v848 = vpop.f32.mrb[0].mxu0
    %849 = vdwg.mxu0
    %850 = vmatprep.subr.bf16.mxu0 0
    %851 = vmatpush1.bf16.msra.mxu0 %v761
    %852 = vmatprep.subr.bf16.mxu0 0
    %853 = vmatpush1.bf16.msra.mxu0 %v762
    %854 = vmatprep.subr.bf16.mxu0 0
    %855 = vmatpush1.bf16.msra.mxu0 %v763
    %856 = vmatprep.subr.bf16.mxu0 0
    %857 = vmatpush1.bf16.msra.mxu0 %v764
    %858 = vmatprep.subr.bf16.mxu0 0
    %859 = vmatpush1.bf16.msra.mxu0 %v765
    %860 = vmatprep.subr.bf16.mxu0 0
    %861 = vmatpush1.bf16.msra.mxu0 %v766
    %862 = vmatprep.subr.bf16.mxu0 0
    %863 = vmatpush1.bf16.msra.mxu0 %v767
    %864 = vmatprep.subr.bf16.mxu0 0
    %865 = vmatpush1.bf16.msra.mxu0 %v768
    %866 = vmatprep.subr.bf16.mxu0 0
    %867 = vmatpush1.bf16.msra.mxu0 %v769
    %868 = vmatprep.subr.bf16.mxu0 0
    %869 = vmatpush1.bf16.msra.mxu0 %v770
    %870 = vmatprep.subr.bf16.mxu0 0
    %871 = vmatpush1.bf16.msra.mxu0 %v771
    %872 = vmatprep.subr.bf16.mxu0 0
    %873 = vmatpush1.bf16.msra.mxu0 %v772
    %874 = vmatprep.subr.bf16.mxu0 0
    %875 = vmatpush1.bf16.msra.mxu0 %v773
    %876 = vmatprep.subr.bf16.mxu0 0
    %877 = vmatpush1.bf16.msra.mxu0 %v774
    %878 = vmatprep.subr.bf16.mxu0 0
    %879 = vmatpush1.bf16.msra.mxu0 %v775
    %880 = vmatprep.subr.bf16.mxu0 0
    %881 = vmatpush1.bf16.msra.mxu0 %v776
    %882 = vmatprep.mubr.bf16.mxu0 %v545
    %883 = vmatmul.mubr.bf16.gmra.mrb[0].mxu0 %v544
    %v884 = vpop.f32.mrb[0].mxu0
    %v885 = vadd.f32 %v844, %v884
    %v886 = vpop.f32.mrb[0].mxu0
    %v887 = vpop.f32.mrb[0].mxu0
    %v888 = vadd.f32 %v847, %v887
    %v889 = vpop.f32.mrb[0].mxu0
    %890 = vdwg.mxu0
    %891 = vst [vmem:[#allocation8] sm:$0xff] %v885
    %892 = vst [vmem:[#allocation8 + $0x8] sm:$0xff] %v888
    // Predicated region
    $region34: #{tpu_custom_call.1} parent=1 // pred_check
      _
    $region35: #{tpu_custom_call.1} parent=1 // pred_check_branch
      %894 = sbr.rel (0) target = $region37
    $region36: #{tpu_custom_call.1} parent=1 // pred_region
      %s896 = ssub.s32 256, 256
      %897 = vsyncadd [#allocation4], %s896
      %s898 = sshll.u32 [#allocation8], 4
      %s899 = int_to_ptr.vmem [resolvable:$true] %s898
      %904 = dma.vmem_to_hbm [thread:$0]  %s899, 256, %s5, [#allocation4], 128, 128, 8
    $region37: #{tpu_custom_call.1} parent=1 // pred_fallthru
      _
    // Predicated region
    $region38: #{tpu_custom_call.1} parent=1 // pred_check
      _
    $region39: #{tpu_custom_call.1} parent=1 // pred_check_branch
      %906 = sbr.rel (0) target = $region41
    $region40: #{tpu_custom_call.1} parent=1 // pred_region
      %907 = dma.done [#allocation4], 256
    $region41: #{tpu_custom_call.1} parent=1 // pred_fallthru
      _
    %908 = vsyncpa [#allocation3], 1
    %909 = vsyncpa [#allocation6], 1
    %910 = vsyncpa [#allocation4], 1

</llo_original>
